<compile_context>
chip_gen: v6e
topology: v6e:2x2x1
jax: 0.10.0
libtpu: 0.0.40
codegen_flags: <defaults>
</compile_context>

<pallas_src>
import jax
import jax.numpy as jnp
from jax.experimental import pallas as pl
from jax.experimental.pallas import tpu as pltpu

NEG_SLOPE = 0.01
DIMS = [17, 128, 64, 32, 12]
IN_PAD = 32  # pad 17 -> 32 on the contraction dim of layer 1


def _leaky_relu(x):
    return jnp.where(x > 0, x, NEG_SLOPE * x)


def qnet_kernel(x_ref,
                w1_ref, b1_ref,
                w2_ref, b2_ref,
                w3_ref, b3_ref,
                w4_ref, b4_ref,
                o_ref):
    # Feature-major: x_ref is (IN_PAD, Bt); weights are (out, in); biases (out, 1).
    x = x_ref[...]
    h1 = _leaky_relu(
        jnp.dot(w1_ref[...], x, preferred_element_type=jnp.float32) + b1_ref[...])
    h2 = _leaky_relu(
        jnp.dot(w2_ref[...], h1, preferred_element_type=jnp.float32) + b2_ref[...])
    h3 = _leaky_relu(
        jnp.dot(w3_ref[...], h2, preferred_element_type=jnp.float32) + b3_ref[...])
    out = jnp.dot(w4_ref[...], h3, preferred_element_type=jnp.float32) + b4_ref[...]
    o_ref[...] = out.astype(o_ref.dtype)


def _round_up(n, m):
    return -(-n // m) * m


def qnet_forward(x, params, *, block_b=512):
    """x: (B, 17) float32.  params: list of 4 (W, b), W shaped (in, out)."""
    B, in_dim = x.shape
    assert in_dim == DIMS[0], (in_dim, DIMS[0])
    out_dim = DIMS[-1]

    # Host-side (one-time) layout plumbing: transpose weights to (out, in),
    # biases to (out, 1), pad layer-1 contraction dim to IN_PAD.
    wts, bs = [], []
    for (w, b) in params:
        wts.append(jnp.asarray(w, jnp.float32).T)          # (out, in)
        bs.append(jnp.asarray(b, jnp.float32).reshape(-1, 1))  # (out, 1)
    wts[0] = jnp.pad(wts[0], ((0, 0), (0, IN_PAD - DIMS[0])))  # (128, IN_PAD)

    # Batch tile: lane axis must be a multiple of 128.
    bt = min(_round_up(block_b, 128), max(128, _round_up(B, 128)))
    B_pad = _round_up(B, bt)
    n_blocks = B_pad // bt

    # Feature-major, zero-padded input slab (IN_PAD, B_pad).
    xt = jnp.zeros((IN_PAD, B_pad), jnp.float32)
    xt = xt.at[:DIMS[0], :B].set(x.T)

    def resident(arr):
        # Whole-array block, constant index -> fetched once, stays in VMEM.
        return pl.BlockSpec(arr.shape, lambda i: (0, 0))

    out_t = pl.pallas_call(
        qnet_kernel,
        out_shape=jax.ShapeDtypeStruct((out_dim, B_pad), jnp.float32),
        grid=(n_blocks,),
        in_specs=[
            pl.BlockSpec((IN_PAD, bt), lambda i: (0, i)),   # streamed x tiles
            resident(wts[0]), resident(bs[0]),
            resident(wts[1]), resident(bs[1]),
            resident(wts[2]), resident(bs[2]),
            resident(wts[3]), resident(bs[3]),
        ],
        out_specs=pl.BlockSpec((out_dim, bt), lambda i: (0, i)),
        compiler_params=pltpu.CompilerParams(
            dimension_semantics=("parallel",),
        ),
    )(xt, wts[0], bs[0], wts[1], bs[1], wts[2], bs[2], wts[3], bs[3])

    # Back to the (B, 12) torch convention; drop batch padding.
    return out_t[:, :B].T


def init_params(key):
    """Mimics nn.Linear's U(-1/sqrt(fan_in), 1/sqrt(fan_in)). W stored (in, out)."""
    params = []
    for i in range(4):
        fan_in, fan_out = DIMS[i], DIMS[i + 1]
        key, kw, kb = jax.random.split(key, 3)
        bound = 1.0 / jnp.sqrt(jnp.float32(fan_in))
        w = jax.random.uniform(kw, (fan_in, fan_out), jnp.float32, -bound, bound)
        b = jax.random.uniform(kb, (1, fan_out), jnp.float32, -bound, bound)
        params.append((w, b))
    return params


def qnet_reference(x, params):
    h = x
    for i, (w, b) in enumerate(params):
        h = h @ w + b
        if i < 3:
            h = jnp.where(h > 0, h, NEG_SLOPE * h)
    return h


if __name__ == "__main__":
    key = jax.random.PRNGKey(0)
    kx, kp, kx2 = jax.random.split(key, 3)
    params = init_params(kp)

    # Small / production-like batch (single tile).
    batch = 8
    x = jax.random.normal(kx, (batch, DIMS[0]), jnp.float32)
    out = jax.block_until_ready(qnet_forward(x, params))
    ref = qnet_reference(x, params)
    assert out.shape == (batch, DIMS[-1]), out.shape
    assert jnp.allclose(out, ref, atol=1e-4, rtol=1e-4), "mismatch vs reference (B=8)"

    # Multi-tile batch with a ragged tail (exercises grid + batch padding).
    batch2 = 300
    x2 = jax.random.normal(kx2, (batch2, DIMS[0]), jnp.float32)
    out2 = jax.block_until_ready(qnet_forward(x2, params, block_b=128))
    ref2 = qnet_reference(x2, params)
    assert out2.shape == (batch2, DIMS[-1]), out2.shape
    assert jnp.allclose(out2, ref2, atol=1e-4, rtol=1e-4), "mismatch vs reference (B=300)"

    print("KERNEL_OK")
</pallas_src>

<mosaic_0001>
module attributes {stable_mosaic.version = 11 : i64} {
  func.func @qnet_kernel(%arg0: i32, %arg1: memref<32x128xf32, #tpu.memory_space<vmem>>, %arg2: memref<128x32xf32, #tpu.memory_space<vmem>>, %arg3: memref<128x1xf32, #tpu.memory_space<vmem>>, %arg4: memref<64x128xf32, #tpu.memory_space<vmem>>, %arg5: memref<64x1xf32, #tpu.memory_space<vmem>>, %arg6: memref<32x64xf32, #tpu.memory_space<vmem>>, %arg7: memref<32x1xf32, #tpu.memory_space<vmem>>, %arg8: memref<12x32xf32, #tpu.memory_space<vmem>>, %arg9: memref<12x1xf32, #tpu.memory_space<vmem>>, %arg10: memref<12x128xf32, #tpu.memory_space<vmem>>) attributes {dimension_semantics = [#tpu.dimension_semantics<parallel>], iteration_bounds = array<i64: 1>, scalar_prefetch = 0 : i64, scratch_operands = 0 : i64, tpu.core_type = #tpu.core_type<tc>, window_params = [{transform_indices = @transform_0, window_bounds = array<i64: 32, 128>}, {pipeline_mode = #tpu.pipeline_mode<synchronous>, transform_indices = @transform_1, window_bounds = array<i64: 128, 32>}, {pipeline_mode = #tpu.pipeline_mode<synchronous>, transform_indices = @transform_2, window_bounds = array<i64: 128, 1>}, {pipeline_mode = #tpu.pipeline_mode<synchronous>, transform_indices = @transform_3, window_bounds = array<i64: 64, 128>}, {pipeline_mode = #tpu.pipeline_mode<synchronous>, transform_indices = @transform_4, window_bounds = array<i64: 64, 1>}, {pipeline_mode = #tpu.pipeline_mode<synchronous>, transform_indices = @transform_5, window_bounds = array<i64: 32, 64>}, {pipeline_mode = #tpu.pipeline_mode<synchronous>, transform_indices = @transform_6, window_bounds = array<i64: 32, 1>}, {pipeline_mode = #tpu.pipeline_mode<synchronous>, transform_indices = @transform_7, window_bounds = array<i64: 12, 32>}, {pipeline_mode = #tpu.pipeline_mode<synchronous>, transform_indices = @transform_8, window_bounds = array<i64: 12, 1>}, {transform_indices = @transform_9, window_bounds = array<i64: 12, 128>}]} {
    %c0 = arith.constant 0 : index
    %c0_0 = arith.constant 0 : index
    %0 = vector.load %arg1[%c0, %c0_0] : memref<32x128xf32, #tpu.memory_space<vmem>>, vector<32x128xf32>
    %c0_1 = arith.constant 0 : index
    %c0_2 = arith.constant 0 : index
    %1 = vector.load %arg2[%c0_1, %c0_2] : memref<128x32xf32, #tpu.memory_space<vmem>>, vector<128x32xf32>
    %cst = arith.constant dense<0.000000e+00> : vector<128x128xf32>
    %2 = tpu.matmul %1, %0, %cst {dimension_numbers = #tpu.dot_dimension_numbers<[1], [0], [0], [1], [0, 0, 1, 1], [], []>} : vector<128x32xf32>, vector<32x128xf32>, vector<128x128xf32> -> vector<128x128xf32>
    %c0_3 = arith.constant 0 : index
    %c0_4 = arith.constant 0 : index
    %3 = vector.load %arg3[%c0_3, %c0_4] : memref<128x1xf32, #tpu.memory_space<vmem>>, vector<128x1xf32>
    %4 = vector.broadcast %3 : vector<128x1xf32> to vector<128x128xf32>
    %5 = arith.addf %2, %4 : vector<128x128xf32>
    %cst_5 = arith.constant 0.000000e+00 : f32
    %6 = vector.broadcast %cst_5 : f32 to vector<128x128xf32>
    %7 = arith.cmpf ogt, %5, %6 : vector<128x128xf32>
    %cst_6 = arith.constant 0.00999999977 : f32
    %8 = vector.broadcast %cst_6 : f32 to vector<128x128xf32>
    %9 = arith.mulf %8, %5 : vector<128x128xf32>
    %10 = arith.select %7, %5, %9 : vector<128x128xi1>, vector<128x128xf32>
    %c0_7 = arith.constant 0 : index
    %c0_8 = arith.constant 0 : index
    %11 = vector.load %arg4[%c0_7, %c0_8] : memref<64x128xf32, #tpu.memory_space<vmem>>, vector<64x128xf32>
    %cst_9 = arith.constant dense<0.000000e+00> : vector<64x128xf32>
    %12 = tpu.matmul %11, %10, %cst_9 {dimension_numbers = #tpu.dot_dimension_numbers<[1], [0], [0], [1], [0, 0, 1, 1], [], []>} : vector<64x128xf32>, vector<128x128xf32>, vector<64x128xf32> -> vector<64x128xf32>
    %c0_10 = arith.constant 0 : index
    %c0_11 = arith.constant 0 : index
    %13 = vector.load %arg5[%c0_10, %c0_11] : memref<64x1xf32, #tpu.memory_space<vmem>>, vector<64x1xf32>
    %14 = vector.broadcast %13 : vector<64x1xf32> to vector<64x128xf32>
    %15 = arith.addf %12, %14 : vector<64x128xf32>
    %cst_12 = arith.constant 0.000000e+00 : f32
    %16 = vector.broadcast %cst_12 : f32 to vector<64x128xf32>
    %17 = arith.cmpf ogt, %15, %16 : vector<64x128xf32>
    %cst_13 = arith.constant 0.00999999977 : f32
    %18 = vector.broadcast %cst_13 : f32 to vector<64x128xf32>
    %19 = arith.mulf %18, %15 : vector<64x128xf32>
    %20 = arith.select %17, %15, %19 : vector<64x128xi1>, vector<64x128xf32>
    %c0_14 = arith.constant 0 : index
    %c0_15 = arith.constant 0 : index
    %21 = vector.load %arg6[%c0_14, %c0_15] : memref<32x64xf32, #tpu.memory_space<vmem>>, vector<32x64xf32>
    %cst_16 = arith.constant dense<0.000000e+00> : vector<32x128xf32>
    %22 = tpu.matmul %21, %20, %cst_16 {dimension_numbers = #tpu.dot_dimension_numbers<[1], [0], [0], [1], [0, 0, 1, 1], [], []>} : vector<32x64xf32>, vector<64x128xf32>, vector<32x128xf32> -> vector<32x128xf32>
    %c0_17 = arith.constant 0 : index
    %c0_18 = arith.constant 0 : index
    %23 = vector.load %arg7[%c0_17, %c0_18] : memref<32x1xf32, #tpu.memory_space<vmem>>, vector<32x1xf32>
    %24 = vector.broadcast %23 : vector<32x1xf32> to vector<32x128xf32>
    %25 = arith.addf %22, %24 : vector<32x128xf32>
    %cst_19 = arith.constant 0.000000e+00 : f32
    %26 = vector.broadcast %cst_19 : f32 to vector<32x128xf32>
    %27 = arith.cmpf ogt, %25, %26 : vector<32x128xf32>
    %cst_20 = arith.constant 0.00999999977 : f32
    %28 = vector.broadcast %cst_20 : f32 to vector<32x128xf32>
    %29 = arith.mulf %28, %25 : vector<32x128xf32>
    %30 = arith.select %27, %25, %29 : vector<32x128xi1>, vector<32x128xf32>
    %c0_21 = arith.constant 0 : index
    %c0_22 = arith.constant 0 : index
    %31 = vector.load %arg8[%c0_21, %c0_22] : memref<12x32xf32, #tpu.memory_space<vmem>>, vector<12x32xf32>
    %cst_23 = arith.constant dense<0.000000e+00> : vector<12x128xf32>
    %32 = tpu.matmul %31, %30, %cst_23 {dimension_numbers = #tpu.dot_dimension_numbers<[1], [0], [0], [1], [0, 0, 1, 1], [], []>} : vector<12x32xf32>, vector<32x128xf32>, vector<12x128xf32> -> vector<12x128xf32>
    %c0_24 = arith.constant 0 : index
    %c0_25 = arith.constant 0 : index
    %33 = vector.load %arg9[%c0_24, %c0_25] : memref<12x1xf32, #tpu.memory_space<vmem>>, vector<12x1xf32>
    %34 = vector.broadcast %33 : vector<12x1xf32> to vector<12x128xf32>
    %35 = arith.addf %32, %34 : vector<12x128xf32>
    %c0_26 = arith.constant 0 : index
    %c0_27 = arith.constant 0 : index
    %36 = vector.load %arg10[%c0_26, %c0_27] : memref<12x128xf32, #tpu.memory_space<vmem>>, vector<12x128xf32>
    tpu.vector_store %arg10[%c0_26, %c0_27], %35 {strides = array<i32>} : memref<12x128xf32, #tpu.memory_space<vmem>>, vector<12x128xf32>,
    return
  }
  func.func @transform_0(%arg0: i32) -> (i32, i32) {
    %c0_i32 = arith.constant 0 : i32
    %c0_i32_0 = arith.constant 0 : i32
    return %c0_i32, %arg0 : i32, i32
  }
  func.func @transform_1(%arg0: i32) -> (i32, i32) {
    %c0_i32 = arith.constant 0 : i32
    %c0_i32_0 = arith.constant 0 : i32
    %c0_i32_1 = arith.constant 0 : i32
    return %c0_i32, %c0_i32_0 : i32, i32
  }
  func.func @transform_2(%arg0: i32) -> (i32, i32) {
    %c0_i32 = arith.constant 0 : i32
    %c0_i32_0 = arith.constant 0 : i32
    %c0_i32_1 = arith.constant 0 : i32
    return %c0_i32, %c0_i32_0 : i32, i32
  }
  func.func @transform_3(%arg0: i32) -> (i32, i32) {
    %c0_i32 = arith.constant 0 : i32
    %c0_i32_0 = arith.constant 0 : i32
    %c0_i32_1 = arith.constant 0 : i32
    return %c0_i32, %c0_i32_0 : i32, i32
  }
  func.func @transform_4(%arg0: i32) -> (i32, i32) {
    %c0_i32 = arith.constant 0 : i32
    %c0_i32_0 = arith.constant 0 : i32
    %c0_i32_1 = arith.constant 0 : i32
    return %c0_i32, %c0_i32_0 : i32, i32
  }
  func.func @transform_5(%arg0: i32) -> (i32, i32) {
    %c0_i32 = arith.constant 0 : i32
    %c0_i32_0 = arith.constant 0 : i32
    %c0_i32_1 = arith.constant 0 : i32
    return %c0_i32, %c0_i32_0 : i32, i32
  }
  func.func @transform_6(%arg0: i32) -> (i32, i32) {
    %c0_i32 = arith.constant 0 : i32
    %c0_i32_0 = arith.constant 0 : i32
    %c0_i32_1 = arith.constant 0 : i32
    return %c0_i32, %c0_i32_0 : i32, i32
  }
  func.func @transform_7(%arg0: i32) -> (i32, i32) {
    %c0_i32 = arith.constant 0 : i32
    %c0_i32_0 = arith.constant 0 : i32
    %c0_i32_1 = arith.constant 0 : i32
    return %c0_i32, %c0_i32_0 : i32, i32
  }
  func.func @transform_8(%arg0: i32) -> (i32, i32) {
    %c0_i32 = arith.constant 0 : i32
    %c0_i32_0 = arith.constant 0 : i32
    %c0_i32_1 = arith.constant 0 : i32
    return %c0_i32, %c0_i32_0 : i32, i32
  }
  func.func @transform_9(%arg0: i32) -> (i32, i32) {
    %c0_i32 = arith.constant 0 : i32
    %c0_i32_0 = arith.constant 0 : i32
    return %c0_i32, %arg0 : i32, i32
  }
}

</mosaic_0001>

<llo_original>
// kernel: tpu_custom_call.1
$region0: #{tpu_custom_call.1}
  #allocation0 [shape = 'u32[]', space=smem, size = 0x4, offset = 0x4, fixed_abs, tag = 'smem constant byte address 0x4 - core index']
  #allocation1 [shape = 'u32[144,128]{1,0:T(1,128)}', space=vmem, size = 0x12000, scoped, tag = 'internal scratch']
  %s0 = inlined_call_operand.vmem [shape: f32[32,128], index: 0, kind: input, shape index: {}]
  %s1 = inlined_call_operand.vmem [shape: f32[128,32], index: 1, kind: input, shape index: {}]
  %s2 = inlined_call_operand.vmem [shape: f32[128,1], index: 2, kind: input, shape index: {}]
  %s3 = inlined_call_operand.vmem [shape: f32[64,128], index: 3, kind: input, shape index: {}]
  %s4 = inlined_call_operand.vmem [shape: f32[64,1], index: 4, kind: input, shape index: {}]
  %s5 = inlined_call_operand.vmem [shape: f32[32,64], index: 5, kind: input, shape index: {}]
  %s6 = inlined_call_operand.vmem [shape: f32[32,1], index: 6, kind: input, shape index: {}]
  %s7 = inlined_call_operand.vmem [shape: f32[12,32], index: 7, kind: input, shape index: {}]
  %s8 = inlined_call_operand.vmem [shape: f32[12,1], index: 8, kind: input, shape index: {}]
  %s9 = inlined_call_operand.hbm [shape: f32[12,128], index: 9, kind: output, shape index: {}]
  %s10 = sld [smem:[#allocation0]]
  $region46: #{tpu_custom_call.1} parent=0
    _
  %s12 = ssub.s32 1, %s10
  %s13 = scalar_select 0, %s12, %s10
  $region1: #{tpu_custom_call.1} parent=0
    #allocation2 [shape = 'u8[8192]{0}', space=vmem, size = 0x2000, scoped, tag = 'output window, operand 0, single buffered']
    #allocation3 [shape = 's32[1]{0}', space=sflag, size = 0x4, scoped, tag = 'scoped memory for tpu_custom_call.1']
    %14 = vsyncpa [#allocation3], 0
    // Predicated region
    $region2: #{tpu_custom_call.1} parent=1 // pred_check
      _
    $region3: #{tpu_custom_call.1} parent=1 // pred_check_branch
      %16 = sbr.rel (0) target = $region5
    $region4: #{tpu_custom_call.1} parent=1 // pred_region
      _
    $region5: #{tpu_custom_call.1} parent=1 // pred_fallthru
      _
    // Predicated region
    $region6: #{tpu_custom_call.1} parent=1 // pred_check
      _
    $region7: #{tpu_custom_call.1} parent=1 // pred_check_branch
      %18 = sbr.rel (0) target = $region9
    $region8: #{tpu_custom_call.1} parent=1 // pred_region
      _
    $region9: #{tpu_custom_call.1} parent=1 // pred_fallthru
      _
    // Predicated region
    $region10: #{tpu_custom_call.1} parent=1 // pred_check
      _
    $region11: #{tpu_custom_call.1} parent=1 // pred_check_branch
      %20 = sbr.rel (0) target = $region13
    $region12: #{tpu_custom_call.1} parent=1 // pred_region
      _
    $region13: #{tpu_custom_call.1} parent=1 // pred_fallthru
      _
    // Predicated region
    $region14: #{tpu_custom_call.1} parent=1 // pred_check
      _
    $region15: #{tpu_custom_call.1} parent=1 // pred_check_branch
      %22 = sbr.rel (0) target = $region17
    $region16: #{tpu_custom_call.1} parent=1 // pred_region
      _
    $region17: #{tpu_custom_call.1} parent=1 // pred_fallthru
      _
    // Predicated region
    $region18: #{tpu_custom_call.1} parent=1 // pred_check
      _
    $region19: #{tpu_custom_call.1} parent=1 // pred_check_branch
      %24 = sbr.rel (0) target = $region21
    $region20: #{tpu_custom_call.1} parent=1 // pred_region
      _
    $region21: #{tpu_custom_call.1} parent=1 // pred_fallthru
      _
    // Predicated region
    $region22: #{tpu_custom_call.1} parent=1 // pred_check
      _
    $region23: #{tpu_custom_call.1} parent=1 // pred_check_branch
      %26 = sbr.rel (0) target = $region25
    $region24: #{tpu_custom_call.1} parent=1 // pred_region
      _
    $region25: #{tpu_custom_call.1} parent=1 // pred_fallthru
      _
    // Predicated region
    $region26: #{tpu_custom_call.1} parent=1 // pred_check
      _
    $region27: #{tpu_custom_call.1} parent=1 // pred_check_branch
      %28 = sbr.rel (0) target = $region29
    $region28: #{tpu_custom_call.1} parent=1 // pred_region
      _
    $region29: #{tpu_custom_call.1} parent=1 // pred_fallthru
      _
    // Predicated region
    $region30: #{tpu_custom_call.1} parent=1 // pred_check
      _
    $region31: #{tpu_custom_call.1} parent=1 // pred_check_branch
      %30 = sbr.rel (0) target = $region33
    $region32: #{tpu_custom_call.1} parent=1 // pred_region
      _
    $region33: #{tpu_custom_call.1} parent=1 // pred_fallthru
      _
    // Predicated region
    $region34: #{tpu_custom_call.1} parent=1 // pred_check
      _
    $region35: #{tpu_custom_call.1} parent=1 // pred_check_branch
      %32 = sbr.rel (0) target = $region37
    $region36: #{tpu_custom_call.1} parent=1 // pred_region
      _
    $region37: #{tpu_custom_call.1} parent=1 // pred_fallthru
      _
    %v33 = vld [vmem:[%s0] sm:$0xff]
    %v34 = vld [vmem:[%s0 + $0x8] sm:$0xff]
    %v35 = vld [vmem:[%s0 + $0x10] sm:$0xff]
    %v36 = vld [vmem:[%s0 + $0x18] sm:$0xff]
    %v37 = vld [vmem:[%s1] sm:$0xff]
    %v38 = vld [vmem:[%s1 + $0x8] sm:$0xff]
    %v39 = vld [vmem:[%s1 + $0x10] sm:$0xff]
    %v40 = vld [vmem:[%s1 + $0x18] sm:$0xff]
    %v41 = vld [vmem:[%s1 + $0x20] sm:$0xff]
    %v42 = vld [vmem:[%s1 + $0x28] sm:$0xff]
    %v43 = vld [vmem:[%s1 + $0x30] sm:$0xff]
    %v44 = vld [vmem:[%s1 + $0x38] sm:$0xff]
    %v45 = vld [vmem:[%s1 + $0x40] sm:$0xff]
    %v46 = vld [vmem:[%s1 + $0x48] sm:$0xff]
    %v47 = vld [vmem:[%s1 + $0x50] sm:$0xff]
    %v48 = vld [vmem:[%s1 + $0x58] sm:$0xff]
    %v49 = vld [vmem:[%s1 + $0x60] sm:$0xff]
    %v50 = vld [vmem:[%s1 + $0x68] sm:$0xff]
    %v51 = vld [vmem:[%s1 + $0x70] sm:$0xff]
    %v52 = vld [vmem:[%s1 + $0x78] sm:$0xff]
    %v53 = vld [vmem:[%s2] sm:$0xff]
    %v54 = vld [vmem:[%s2 + $0x8] sm:$0xff]
    %v55 = vld [vmem:[%s2 + $0x10] sm:$0xff]
    %v56 = vld [vmem:[%s2 + $0x18] sm:$0xff]
    %v57 = vld [vmem:[%s2 + $0x20] sm:$0xff]
    %v58 = vld [vmem:[%s2 + $0x28] sm:$0xff]
    %v59 = vld [vmem:[%s2 + $0x30] sm:$0xff]
    %v60 = vld [vmem:[%s2 + $0x38] sm:$0xff]
    %v61 = vld [vmem:[%s2 + $0x40] sm:$0xff]
    %v62 = vld [vmem:[%s2 + $0x48] sm:$0xff]
    %v63 = vld [vmem:[%s2 + $0x50] sm:$0xff]
    %v64 = vld [vmem:[%s2 + $0x58] sm:$0xff]
    %v65 = vld [vmem:[%s2 + $0x60] sm:$0xff]
    %v66 = vld [vmem:[%s2 + $0x68] sm:$0xff]
    %v67 = vld [vmem:[%s2 + $0x70] sm:$0xff]
    %v68 = vld [vmem:[%s2 + $0x78] sm:$0xff]
    %70 = vset.pattern.permute.xlu0 0
    %71 = vperm.xlu0 %70, %v53
    %v72 = vpop.permute.xlu0 %71
    %75 = vset.pattern.permute.xlu0 0
    %76 = vperm.xlu0 %75, %v54
    %v77 = vpop.permute.xlu0 %76
    %80 = vset.pattern.permute.xlu0 0
    %81 = vperm.xlu0 %80, %v55
    %v82 = vpop.permute.xlu0 %81
    %85 = vset.pattern.permute.xlu0 0
    %86 = vperm.xlu0 %85, %v56
    %v87 = vpop.permute.xlu0 %86
    %90 = vset.pattern.permute.xlu0 0
    %91 = vperm.xlu0 %90, %v57
    %v92 = vpop.permute.xlu0 %91
    %95 = vset.pattern.permute.xlu0 0
    %96 = vperm.xlu0 %95, %v58
    %v97 = vpop.permute.xlu0 %96
    %100 = vset.pattern.permute.xlu0 0
    %101 = vperm.xlu0 %100, %v59
    %v102 = vpop.permute.xlu0 %101
    %105 = vset.pattern.permute.xlu0 0
    %106 = vperm.xlu0 %105, %v60
    %v107 = vpop.permute.xlu0 %106
    %110 = vset.pattern.permute.xlu0 0
    %111 = vperm.xlu0 %110, %v61
    %v112 = vpop.permute.xlu0 %111
    %115 = vset.pattern.permute.xlu0 0
    %116 = vperm.xlu0 %115, %v62
    %v117 = vpop.permute.xlu0 %116
    %120 = vset.pattern.permute.xlu0 0
    %121 = vperm.xlu0 %120, %v63
    %v122 = vpop.permute.xlu0 %121
    %125 = vset.pattern.permute.xlu0 0
    %126 = vperm.xlu0 %125, %v64
    %v127 = vpop.permute.xlu0 %126
    %130 = vset.pattern.permute.xlu0 0
    %131 = vperm.xlu0 %130, %v65
    %v132 = vpop.permute.xlu0 %131
    %135 = vset.pattern.permute.xlu0 0
    %136 = vperm.xlu0 %135, %v66
    %v137 = vpop.permute.xlu0 %136
    %140 = vset.pattern.permute.xlu0 0
    %141 = vperm.xlu0 %140, %v67
    %v142 = vpop.permute.xlu0 %141
    %145 = vset.pattern.permute.xlu0 0
    %146 = vperm.xlu0 %145, %v68
    %v147 = vpop.permute.xlu0 %146
    %vm149 = vcmask 261120
    %v151 = vsel %vm149, %v37, 0
    %v154 = vsel %vm149, %v38, 0
    %v157 = vsel %vm149, %v39, 0
    %v160 = vsel %vm149, %v40, 0
    %v163 = vsel %vm149, %v41, 0
    %v166 = vsel %vm149, %v42, 0
    %v169 = vsel %vm149, %v43, 0
    %v172 = vsel %vm149, %v44, 0
    %v175 = vsel %vm149, %v45, 0
    %v178 = vsel %vm149, %v46, 0
    %v181 = vsel %vm149, %v47, 0
    %v184 = vsel %vm149, %v48, 0
    %v187 = vsel %vm149, %v49, 0
    %v190 = vsel %vm149, %v50, 0
    %v193 = vsel %vm149, %v51, 0
    %v196 = vsel %vm149, %v52, 0
    %198 = vmatprep.subr.mxu0 0.0
    %199 = vmatpush1.msra.mxu0 0.0
    %200 = vmatprep.subr.mxu0 0.0
    %201 = vmatpush1.msra.mxu0 0.0
    %202 = vmatprep.subr.mxu0 0.0
    %203 = vmatpush1.msra.mxu0 0.0
    %204 = vmatprep.subr.mxu0 0.0
    %205 = vmatpush1.msra.mxu0 0.0
    %206 = vmatprep.subr.mxu0 0.0
    %207 = vmatpush1.msra.mxu0 0.0
    %208 = vmatprep.subr.mxu0 0.0
    %209 = vmatpush1.msra.mxu0 0.0
    %210 = vmatprep.subr.mxu0 0.0
    %211 = vmatpush1.msra.mxu0 0.0
    %212 = vmatprep.subr.mxu0 0.0
    %213 = vmatpush1.msra.mxu0 0.0
    %214 = vmatprep.subr.mxu0 0.0
    %215 = vmatpush1.msra.mxu0 0.0
    %216 = vmatprep.subr.mxu0 0.0
    %217 = vmatpush1.msra.mxu0 0.0
    %218 = vmatprep.subr.mxu0 0.0
    %219 = vmatpush1.msra.mxu0 0.0
    %220 = vmatprep.subr.mxu0 0.0
    %221 = vmatpush1.msra.mxu0 0.0
    %222 = vmatprep.subr.mxu0 0.0
    %223 = vmatpush1.msra.mxu0 %v36
    %224 = vmatprep.subr.mxu0 0.0
    %225 = vmatpush1.msra.mxu0 %v35
    %226 = vmatprep.subr.mxu0 0.0
    %227 = vmatpush1.msra.mxu0 %v34
    %228 = vmatprep.subr.mxu0 0.0
    %229 = vmatpush1.msra.mxu0 %v33
    %230 = vmatprep.subr.mxu0 0.0
    %231 = vmatpush2.msra.mxu0 0.0
    %232 = vmatprep.subr.mxu0 0.0
    %233 = vmatpush2.msra.mxu0 0.0
    %234 = vmatprep.subr.mxu0 0.0
    %235 = vmatpush2.msra.mxu0 0.0
    %236 = vmatprep.subr.mxu0 0.0
    %237 = vmatpush2.msra.mxu0 0.0
    %238 = vmatprep.subr.mxu0 0.0
    %239 = vmatpush2.msra.mxu0 0.0
    %240 = vmatprep.subr.mxu0 0.0
    %241 = vmatpush2.msra.mxu0 0.0
    %242 = vmatprep.subr.mxu0 0.0
    %243 = vmatpush2.msra.mxu0 0.0
    %244 = vmatprep.subr.mxu0 0.0
    %245 = vmatpush2.msra.mxu0 0.0
    %246 = vmatprep.subr.mxu0 0.0
    %247 = vmatpush2.msra.mxu0 0.0
    %248 = vmatprep.subr.mxu0 0.0
    %249 = vmatpush2.msra.mxu0 0.0
    %250 = vmatprep.subr.mxu0 0.0
    %251 = vmatpush2.msra.mxu0 0.0
    %252 = vmatprep.subr.mxu0 0.0
    %253 = vmatpush2.msra.mxu0 0.0
    %254 = vmatprep.subr.mxu0 0.0
    %255 = vmatpush2.msra.mxu0 0.0
    %256 = vmatprep.subr.mxu0 0.0
    %257 = vmatpush2.msra.mxu0 0.0
    %258 = vmatprep.subr.mxu0 0.0
    %259 = vmatpush2.msra.mxu0 0.0
    %260 = vmatprep.subr.mxu0 0.0
    %261 = vmatpush2.msra.mxu0 0.0
    %262 = vmatprep.mubr.f32.mxu0 0.0
    %263 = vmatmul.mubr.f32.gmra.mxu0 %v151
    %v264 = vpop.f32.mrf.mxu0
    %v265 = vadd.f32 %v72, %v264
    %v266 = vpop.f32.mrf.mxu0
    %267 = vmatprep.mubr.f32.mxu0 0.0
    %268 = vmatmul.mubr.f32.gmra.mxu0 %v154
    %v269 = vpop.f32.mrf.mxu0
    %v270 = vadd.f32 %v77, %v269
    %v271 = vpop.f32.mrf.mxu0
    %272 = vmatprep.mubr.f32.mxu0 0.0
    %273 = vmatmul.mubr.f32.gmra.mxu0 %v157
    %v274 = vpop.f32.mrf.mxu0
    %v275 = vadd.f32 %v82, %v274
    %v276 = vpop.f32.mrf.mxu0
    %277 = vmatprep.mubr.f32.mxu0 0.0
    %278 = vmatmul.mubr.f32.gmra.mxu0 %v160
    %v279 = vpop.f32.mrf.mxu0
    %v280 = vadd.f32 %v87, %v279
    %v281 = vpop.f32.mrf.mxu0
    %282 = vmatprep.mubr.f32.mxu0 0.0
    %283 = vmatmul.mubr.f32.gmra.mxu0 %v163
    %v284 = vpop.f32.mrf.mxu0
    %v285 = vadd.f32 %v92, %v284
    %v286 = vpop.f32.mrf.mxu0
    %287 = vmatprep.mubr.f32.mxu0 0.0
    %288 = vmatmul.mubr.f32.gmra.mxu0 %v166
    %v289 = vpop.f32.mrf.mxu0
    %v290 = vadd.f32 %v97, %v289
    %v291 = vpop.f32.mrf.mxu0
    %292 = vmatprep.mubr.f32.mxu0 0.0
    %293 = vmatmul.mubr.f32.gmra.mxu0 %v169
    %v294 = vpop.f32.mrf.mxu0
    %v295 = vadd.f32 %v102, %v294
    %v296 = vpop.f32.mrf.mxu0
    %297 = vmatprep.mubr.f32.mxu0 0.0
    %298 = vmatmul.mubr.f32.gmra.mxu0 %v172
    %v299 = vpop.f32.mrf.mxu0
    %v300 = vadd.f32 %v107, %v299
    %v301 = vpop.f32.mrf.mxu0
    %302 = vmatprep.mubr.f32.mxu0 0.0
    %303 = vmatmul.mubr.f32.gmra.mxu0 %v175
    %v304 = vpop.f32.mrf.mxu0
    %v305 = vadd.f32 %v112, %v304
    %v306 = vpop.f32.mrf.mxu0
    %307 = vmatprep.mubr.f32.mxu0 0.0
    %308 = vmatmul.mubr.f32.gmra.mxu0 %v178
    %v309 = vpop.f32.mrf.mxu0
    %v310 = vadd.f32 %v117, %v309
    %v311 = vpop.f32.mrf.mxu0
    %312 = vmatprep.mubr.f32.mxu0 0.0
    %313 = vmatmul.mubr.f32.gmra.mxu0 %v181
    %v314 = vpop.f32.mrf.mxu0
    %v315 = vadd.f32 %v122, %v314
    %v316 = vpop.f32.mrf.mxu0
    %317 = vmatprep.mubr.f32.mxu0 0.0
    %318 = vmatmul.mubr.f32.gmra.mxu0 %v184
    %v319 = vpop.f32.mrf.mxu0
    %v320 = vadd.f32 %v127, %v319
    %v321 = vpop.f32.mrf.mxu0
    %322 = vmatprep.mubr.f32.mxu0 0.0
    %323 = vmatmul.mubr.f32.gmra.mxu0 %v187
    %v324 = vpop.f32.mrf.mxu0
    %v325 = vadd.f32 %v132, %v324
    %v326 = vpop.f32.mrf.mxu0
    %327 = vmatprep.mubr.f32.mxu0 0.0
    %328 = vmatmul.mubr.f32.gmra.mxu0 %v190
    %v329 = vpop.f32.mrf.mxu0
    %v330 = vadd.f32 %v137, %v329
    %v331 = vpop.f32.mrf.mxu0
    %332 = vmatprep.mubr.f32.mxu0 0.0
    %333 = vmatmul.mubr.f32.gmra.mxu0 %v193
    %v334 = vpop.f32.mrf.mxu0
    %v335 = vadd.f32 %v142, %v334
    %v336 = vpop.f32.mrf.mxu0
    %337 = vmatprep.mubr.f32.mxu0 0.0
    %338 = vmatmul.mubr.f32.gmra.mxu0 %v196
    %v339 = vpop.f32.mrf.mxu0
    %v340 = vadd.f32 %v147, %v339
    %v341 = vpop.f32.mrf.mxu0
    %342 = vdwg.mxu0
    %vm343 = vcmp.gt.f32.partialorder %v265, 0.0
    %vm344 = vcmp.gt.f32.partialorder %v270, 0.0
    %vm345 = vcmp.gt.f32.partialorder %v275, 0.0
    %vm346 = vcmp.gt.f32.partialorder %v280, 0.0
    %vm347 = vcmp.gt.f32.partialorder %v285, 0.0
    %vm348 = vcmp.gt.f32.partialorder %v290, 0.0
    %vm349 = vcmp.gt.f32.partialorder %v295, 0.0
    %vm350 = vcmp.gt.f32.partialorder %v300, 0.0
    %vm351 = vcmp.gt.f32.partialorder %v305, 0.0
    %vm352 = vcmp.gt.f32.partialorder %v310, 0.0
    %vm353 = vcmp.gt.f32.partialorder %v315, 0.0
    %vm354 = vcmp.gt.f32.partialorder %v320, 0.0
    %vm355 = vcmp.gt.f32.partialorder %v325, 0.0
    %vm356 = vcmp.gt.f32.partialorder %v330, 0.0
    %vm357 = vcmp.gt.f32.partialorder %v335, 0.0
    %vm358 = vcmp.gt.f32.partialorder %v340, 0.0
    %v359 = vmul.f32 %v265, 0.01
    %v360 = vmul.f32 %v270, 0.01
    %v361 = vmul.f32 %v275, 0.01
    %v362 = vmul.f32 %v280, 0.01
    %v363 = vmul.f32 %v285, 0.01
    %v364 = vmul.f32 %v290, 0.01
    %v365 = vmul.f32 %v295, 0.01
    %v366 = vmul.f32 %v300, 0.01
    %v367 = vmul.f32 %v305, 0.01
    %v368 = vmul.f32 %v310, 0.01
    %v369 = vmul.f32 %v315, 0.01
    %v370 = vmul.f32 %v320, 0.01
    %v371 = vmul.f32 %v325, 0.01
    %v372 = vmul.f32 %v330, 0.01
    %v373 = vmul.f32 %v335, 0.01
    %v374 = vmul.f32 %v340, 0.01
    %v375 = vsel %vm343, %v265, %v359
    %v376 = vsel %vm344, %v270, %v360
    %v377 = vsel %vm345, %v275, %v361
    %v378 = vsel %vm346, %v280, %v362
    %v379 = vsel %vm347, %v285, %v363
    %v380 = vsel %vm348, %v290, %v364
    %v381 = vsel %vm349, %v295, %v365
    %v382 = vsel %vm350, %v300, %v366
    %v383 = vsel %vm351, %v305, %v367
    %v384 = vsel %vm352, %v310, %v368
    %v385 = vsel %vm353, %v315, %v369
    %v386 = vsel %vm354, %v320, %v370
    %v387 = vsel %vm355, %v325, %v371
    %v388 = vsel %vm356, %v330, %v372
    %v389 = vsel %vm357, %v335, %v373
    %v390 = vsel %vm358, %v340, %v374
    %v391 = vld [vmem:[%s3] sm:$0xff]
    %v392 = vld [vmem:[%s3 + $0x8] sm:$0xff]
    %v393 = vld [vmem:[%s3 + $0x10] sm:$0xff]
    %v394 = vld [vmem:[%s3 + $0x18] sm:$0xff]
    %v395 = vld [vmem:[%s3 + $0x20] sm:$0xff]
    %v396 = vld [vmem:[%s3 + $0x28] sm:$0xff]
    %v397 = vld [vmem:[%s3 + $0x30] sm:$0xff]
    %v398 = vld [vmem:[%s3 + $0x38] sm:$0xff]
    %v399 = vld [vmem:[%s4] sm:$0xff]
    %v400 = vld [vmem:[%s4 + $0x8] sm:$0xff]
    %v401 = vld [vmem:[%s4 + $0x10] sm:$0xff]
    %v402 = vld [vmem:[%s4 + $0x18] sm:$0xff]
    %v403 = vld [vmem:[%s4 + $0x20] sm:$0xff]
    %v404 = vld [vmem:[%s4 + $0x28] sm:$0xff]
    %v405 = vld [vmem:[%s4 + $0x30] sm:$0xff]
    %v406 = vld [vmem:[%s4 + $0x38] sm:$0xff]
    %408 = vset.pattern.permute.xlu0 0
    %409 = vperm.xlu0 %408, %v399
    %v410 = vpop.permute.xlu0 %409
    %413 = vset.pattern.permute.xlu0 0
    %414 = vperm.xlu0 %413, %v400
    %v415 = vpop.permute.xlu0 %414
    %418 = vset.pattern.permute.xlu0 0
    %419 = vperm.xlu0 %418, %v401
    %v420 = vpop.permute.xlu0 %419
    %423 = vset.pattern.permute.xlu0 0
    %424 = vperm.xlu0 %423, %v402
    %v425 = vpop.permute.xlu0 %424
    %428 = vset.pattern.permute.xlu0 0
    %429 = vperm.xlu0 %428, %v403
    %v430 = vpop.permute.xlu0 %429
    %433 = vset.pattern.permute.xlu0 0
    %434 = vperm.xlu0 %433, %v404
    %v435 = vpop.permute.xlu0 %434
    %438 = vset.pattern.permute.xlu0 0
    %439 = vperm.xlu0 %438, %v405
    %v440 = vpop.permute.xlu0 %439
    %443 = vset.pattern.permute.xlu0 0
    %444 = vperm.xlu0 %443, %v406
    %v445 = vpop.permute.xlu0 %444
    %447 = vmatprep.subr.mxu0 0.0
    %448 = vmatpush1.msra.mxu0 %v390
    %449 = vmatprep.subr.mxu0 0.0
    %450 = vmatpush1.msra.mxu0 %v389
    %451 = vmatprep.subr.mxu0 0.0
    %452 = vmatpush1.msra.mxu0 %v388
    %453 = vmatprep.subr.mxu0 0.0
    %454 = vmatpush1.msra.mxu0 %v387
    %455 = vmatprep.subr.mxu0 0.0
    %456 = vmatpush1.msra.mxu0 %v386
    %457 = vmatprep.subr.mxu0 0.0
    %458 = vmatpush1.msra.mxu0 %v385
    %459 = vmatprep.subr.mxu0 0.0
    %460 = vmatpush1.msra.mxu0 %v384
    %461 = vmatprep.subr.mxu0 0.0
    %462 = vmatpush1.msra.mxu0 %v383
    %463 = vmatprep.subr.mxu0 0.0
    %464 = vmatpush1.msra.mxu0 %v382
    %465 = vmatprep.subr.mxu0 0.0
    %466 = vmatpush1.msra.mxu0 %v381
    %467 = vmatprep.subr.mxu0 0.0
    %468 = vmatpush1.msra.mxu0 %v380
    %469 = vmatprep.subr.mxu0 0.0
    %470 = vmatpush1.msra.mxu0 %v379
    %471 = vmatprep.subr.mxu0 0.0
    %472 = vmatpush1.msra.mxu0 %v378
    %473 = vmatprep.subr.mxu0 0.0
    %474 = vmatpush1.msra.mxu0 %v377
    %475 = vmatprep.subr.mxu0 0.0
    %476 = vmatpush1.msra.mxu0 %v376
    %477 = vmatprep.subr.mxu0 0.0
    %478 = vmatpush1.msra.mxu0 %v375
    %479 = vmatprep.subr.mxu0 0.0
    %480 = vmatpush2.msra.mxu0 0.0
    %481 = vmatprep.subr.mxu0 0.0
    %482 = vmatpush2.msra.mxu0 0.0
    %483 = vmatprep.subr.mxu0 0.0
    %484 = vmatpush2.msra.mxu0 0.0
    %485 = vmatprep.subr.mxu0 0.0
    %486 = vmatpush2.msra.mxu0 0.0
    %487 = vmatprep.subr.mxu0 0.0
    %488 = vmatpush2.msra.mxu0 0.0
    %489 = vmatprep.subr.mxu0 0.0
    %490 = vmatpush2.msra.mxu0 0.0
    %491 = vmatprep.subr.mxu0 0.0
    %492 = vmatpush2.msra.mxu0 0.0
    %493 = vmatprep.subr.mxu0 0.0
    %494 = vmatpush2.msra.mxu0 0.0
    %495 = vmatprep.subr.mxu0 0.0
    %496 = vmatpush2.msra.mxu0 0.0
    %497 = vmatprep.subr.mxu0 0.0
    %498 = vmatpush2.msra.mxu0 0.0
    %499 = vmatprep.subr.mxu0 0.0
    %500 = vmatpush2.msra.mxu0 0.0
    %501 = vmatprep.subr.mxu0 0.0
    %502 = vmatpush2.msra.mxu0 0.0
    %503 = vmatprep.subr.mxu0 0.0
    %504 = vmatpush2.msra.mxu0 0.0
    %505 = vmatprep.subr.mxu0 0.0
    %506 = vmatpush2.msra.mxu0 0.0
    %507 = vmatprep.subr.mxu0 0.0
    %508 = vmatpush2.msra.mxu0 0.0
    %509 = vmatprep.subr.mxu0 0.0
    %510 = vmatpush2.msra.mxu0 0.0
    %511 = vmatprep.mubr.f32.mxu0 0.0
    %512 = vmatmul.mubr.f32.gmra.mxu0 %v391
    %v513 = vpop.f32.mrf.mxu0
    %v514 = vadd.f32 %v410, %v513
    %v515 = vpop.f32.mrf.mxu0
    %516 = vmatprep.mubr.f32.mxu0 0.0
    %517 = vmatmul.mubr.f32.gmra.mxu0 %v392
    %v518 = vpop.f32.mrf.mxu0
    %v519 = vadd.f32 %v415, %v518
    %v520 = vpop.f32.mrf.mxu0
    %521 = vmatprep.mubr.f32.mxu0 0.0
    %522 = vmatmul.mubr.f32.gmra.mxu0 %v393
    %v523 = vpop.f32.mrf.mxu0
    %v524 = vadd.f32 %v420, %v523
    %v525 = vpop.f32.mrf.mxu0
    %526 = vmatprep.mubr.f32.mxu0 0.0
    %527 = vmatmul.mubr.f32.gmra.mxu0 %v394
    %v528 = vpop.f32.mrf.mxu0
    %v529 = vadd.f32 %v425, %v528
    %v530 = vpop.f32.mrf.mxu0
    %531 = vmatprep.mubr.f32.mxu0 0.0
    %532 = vmatmul.mubr.f32.gmra.mxu0 %v395
    %v533 = vpop.f32.mrf.mxu0
    %v534 = vadd.f32 %v430, %v533
    %v535 = vpop.f32.mrf.mxu0
    %536 = vmatprep.mubr.f32.mxu0 0.0
    %537 = vmatmul.mubr.f32.gmra.mxu0 %v396
    %v538 = vpop.f32.mrf.mxu0
    %v539 = vadd.f32 %v435, %v538
    %v540 = vpop.f32.mrf.mxu0
    %541 = vmatprep.mubr.f32.mxu0 0.0
    %542 = vmatmul.mubr.f32.gmra.mxu0 %v397
    %v543 = vpop.f32.mrf.mxu0
    %v544 = vadd.f32 %v440, %v543
    %v545 = vpop.f32.mrf.mxu0
    %546 = vmatprep.mubr.f32.mxu0 0.0
    %547 = vmatmul.mubr.f32.gmra.mxu0 %v398
    %v548 = vpop.f32.mrf.mxu0
    %v549 = vadd.f32 %v445, %v548
    %v550 = vpop.f32.mrf.mxu0
    %551 = vdwg.mxu0
    %vm552 = vcmp.gt.f32.partialorder %v514, 0.0
    %vm553 = vcmp.gt.f32.partialorder %v519, 0.0
    %vm554 = vcmp.gt.f32.partialorder %v524, 0.0
    %vm555 = vcmp.gt.f32.partialorder %v529, 0.0
    %vm556 = vcmp.gt.f32.partialorder %v534, 0.0
    %vm557 = vcmp.gt.f32.partialorder %v539, 0.0
    %vm558 = vcmp.gt.f32.partialorder %v544, 0.0
    %vm559 = vcmp.gt.f32.partialorder %v549, 0.0
    %v560 = vmul.f32 %v514, 0.01
    %v561 = vmul.f32 %v519, 0.01
    %v562 = vmul.f32 %v524, 0.01
    %v563 = vmul.f32 %v529, 0.01
    %v564 = vmul.f32 %v534, 0.01
    %v565 = vmul.f32 %v539, 0.01
    %v566 = vmul.f32 %v544, 0.01
    %v567 = vmul.f32 %v549, 0.01
    %v568 = vsel %vm552, %v514, %v560
    %v569 = vsel %vm553, %v519, %v561
    %v570 = vsel %vm554, %v524, %v562
    %v571 = vsel %vm555, %v529, %v563
    %v572 = vsel %vm556, %v534, %v564
    %v573 = vsel %vm557, %v539, %v565
    %v574 = vsel %vm558, %v544, %v566
    %v575 = vsel %vm559, %v549, %v567
    %v576 = vld [vmem:[%s5] sm:$0xff]
    %v577 = vld [vmem:[%s5 + $0x8] sm:$0xff]
    %v578 = vld [vmem:[%s5 + $0x10] sm:$0xff]
    %v579 = vld [vmem:[%s5 + $0x18] sm:$0xff]
    %v580 = vld [vmem:[%s6] sm:$0xff]
    %v581 = vld [vmem:[%s6 + $0x8] sm:$0xff]
    %v582 = vld [vmem:[%s6 + $0x10] sm:$0xff]
    %v583 = vld [vmem:[%s6 + $0x18] sm:$0xff]
    %585 = vset.pattern.permute.xlu0 0
    %586 = vperm.xlu0 %585, %v580
    %v587 = vpop.permute.xlu0 %586
    %590 = vset.pattern.permute.xlu0 0
    %591 = vperm.xlu0 %590, %v581
    %v592 = vpop.permute.xlu0 %591
    %595 = vset.pattern.permute.xlu0 0
    %596 = vperm.xlu0 %595, %v582
    %v597 = vpop.permute.xlu0 %596
    %600 = vset.pattern.permute.xlu0 0
    %601 = vperm.xlu0 %600, %v583
    %v602 = vpop.permute.xlu0 %601
    %vm604 = vcmask 523264
    %v606 = vsel %vm604, %v576, 0
    %v609 = vsel %vm604, %v577, 0
    %v612 = vsel %vm604, %v578, 0
    %v615 = vsel %vm604, %v579, 0
    %617 = vmatprep.subr.mxu0 0.0
    %618 = vmatpush1.msra.mxu0 0.0
    %619 = vmatprep.subr.mxu0 0.0
    %620 = vmatpush1.msra.mxu0 0.0
    %621 = vmatprep.subr.mxu0 0.0
    %622 = vmatpush1.msra.mxu0 0.0
    %623 = vmatprep.subr.mxu0 0.0
    %624 = vmatpush1.msra.mxu0 0.0
    %625 = vmatprep.subr.mxu0 0.0
    %626 = vmatpush1.msra.mxu0 0.0
    %627 = vmatprep.subr.mxu0 0.0
    %628 = vmatpush1.msra.mxu0 0.0
    %629 = vmatprep.subr.mxu0 0.0
    %630 = vmatpush1.msra.mxu0 0.0
    %631 = vmatprep.subr.mxu0 0.0
    %632 = vmatpush1.msra.mxu0 0.0
    %633 = vmatprep.subr.mxu0 0.0
    %634 = vmatpush1.msra.mxu0 %v575
    %635 = vmatprep.subr.mxu0 0.0
    %636 = vmatpush1.msra.mxu0 %v574
    %637 = vmatprep.subr.mxu0 0.0
    %638 = vmatpush1.msra.mxu0 %v573
    %639 = vmatprep.subr.mxu0 0.0
    %640 = vmatpush1.msra.mxu0 %v572
    %641 = vmatprep.subr.mxu0 0.0
    %642 = vmatpush1.msra.mxu0 %v571
    %643 = vmatprep.subr.mxu0 0.0
    %644 = vmatpush1.msra.mxu0 %v570
    %645 = vmatprep.subr.mxu0 0.0
    %646 = vmatpush1.msra.mxu0 %v569
    %647 = vmatprep.subr.mxu0 0.0
    %648 = vmatpush1.msra.mxu0 %v568
    %649 = vmatprep.subr.mxu0 0.0
    %650 = vmatpush2.msra.mxu0 0.0
    %651 = vmatprep.subr.mxu0 0.0
    %652 = vmatpush2.msra.mxu0 0.0
    %653 = vmatprep.subr.mxu0 0.0
    %654 = vmatpush2.msra.mxu0 0.0
    %655 = vmatprep.subr.mxu0 0.0
    %656 = vmatpush2.msra.mxu0 0.0
    %657 = vmatprep.subr.mxu0 0.0
    %658 = vmatpush2.msra.mxu0 0.0
    %659 = vmatprep.subr.mxu0 0.0
    %660 = vmatpush2.msra.mxu0 0.0
    %661 = vmatprep.subr.mxu0 0.0
    %662 = vmatpush2.msra.mxu0 0.0
    %663 = vmatprep.subr.mxu0 0.0
    %664 = vmatpush2.msra.mxu0 0.0
    %665 = vmatprep.subr.mxu0 0.0
    %666 = vmatpush2.msra.mxu0 0.0
    %667 = vmatprep.subr.mxu0 0.0
    %668 = vmatpush2.msra.mxu0 0.0
    %669 = vmatprep.subr.mxu0 0.0
    %670 = vmatpush2.msra.mxu0 0.0
    %671 = vmatprep.subr.mxu0 0.0
    %672 = vmatpush2.msra.mxu0 0.0
    %673 = vmatprep.subr.mxu0 0.0
    %674 = vmatpush2.msra.mxu0 0.0
    %675 = vmatprep.subr.mxu0 0.0
    %676 = vmatpush2.msra.mxu0 0.0
    %677 = vmatprep.subr.mxu0 0.0
    %678 = vmatpush2.msra.mxu0 0.0
    %679 = vmatprep.subr.mxu0 0.0
    %680 = vmatpush2.msra.mxu0 0.0
    %681 = vmatprep.mubr.f32.mxu0 0.0
    %682 = vmatmul.mubr.f32.gmra.mxu0 %v606
    %v683 = vpop.f32.mrf.mxu0
    %v684 = vadd.f32 %v587, %v683
    %v685 = vpop.f32.mrf.mxu0
    %686 = vmatprep.mubr.f32.mxu0 0.0
    %687 = vmatmul.mubr.f32.gmra.mxu0 %v609
    %v688 = vpop.f32.mrf.mxu0
    %v689 = vadd.f32 %v592, %v688
    %v690 = vpop.f32.mrf.mxu0
    %691 = vmatprep.mubr.f32.mxu0 0.0
    %692 = vmatmul.mubr.f32.gmra.mxu0 %v612
    %v693 = vpop.f32.mrf.mxu0
    %v694 = vadd.f32 %v597, %v693
    %v695 = vpop.f32.mrf.mxu0
    %696 = vmatprep.mubr.f32.mxu0 0.0
    %697 = vmatmul.mubr.f32.gmra.mxu0 %v615
    %v698 = vpop.f32.mrf.mxu0
    %v699 = vadd.f32 %v602, %v698
    %v700 = vpop.f32.mrf.mxu0
    %701 = vdwg.mxu0
    %vm702 = vcmp.gt.f32.partialorder %v684, 0.0
    %vm703 = vcmp.gt.f32.partialorder %v689, 0.0
    %vm704 = vcmp.gt.f32.partialorder %v694, 0.0
    %vm705 = vcmp.gt.f32.partialorder %v699, 0.0
    %v706 = vmul.f32 %v684, 0.01
    %v707 = vmul.f32 %v689, 0.01
    %v708 = vmul.f32 %v694, 0.01
    %v709 = vmul.f32 %v699, 0.01
    %v710 = vsel %vm702, %v684, %v706
    %v711 = vsel %vm703, %v689, %v707
    %v712 = vsel %vm704, %v694, %v708
    %v713 = vsel %vm705, %v699, %v709
    %v714 = vld [vmem:[%s7] sm:$0xff]
    %v715 = vld [vmem:[%s7 + $0x8] sm:$0xf]
    %v716 = vld [vmem:[%s8] sm:$0xff]
    %v717 = vld [vmem:[%s8 + $0x8] sm:$0xf]
    %719 = vset.pattern.permute.xlu0 0
    %720 = vperm.xlu0 %719, %v716
    %v721 = vpop.permute.xlu0 %720
    %724 = vset.pattern.permute.xlu0 0
    %725 = vperm.xlu0 %724, %v717
    %v726 = vpop.permute.xlu0 %725
    %v729 = vsel %vm149, %v714, 0
    %v732 = vsel %vm149, %v715, 0
    %734 = vmatprep.subr.mxu0 0.0
    %735 = vmatpush1.msra.mxu0 0.0
    %736 = vmatprep.subr.mxu0 0.0
    %737 = vmatpush1.msra.mxu0 0.0
    %738 = vmatprep.subr.mxu0 0.0
    %739 = vmatpush1.msra.mxu0 0.0
    %740 = vmatprep.subr.mxu0 0.0
    %741 = vmatpush1.msra.mxu0 0.0
    %742 = vmatprep.subr.mxu0 0.0
    %743 = vmatpush1.msra.mxu0 0.0
    %744 = vmatprep.subr.mxu0 0.0
    %745 = vmatpush1.msra.mxu0 0.0
    %746 = vmatprep.subr.mxu0 0.0
    %747 = vmatpush1.msra.mxu0 0.0
    %748 = vmatprep.subr.mxu0 0.0
    %749 = vmatpush1.msra.mxu0 0.0
    %750 = vmatprep.subr.mxu0 0.0
    %751 = vmatpush1.msra.mxu0 0.0
    %752 = vmatprep.subr.mxu0 0.0
    %753 = vmatpush1.msra.mxu0 0.0
    %754 = vmatprep.subr.mxu0 0.0
    %755 = vmatpush1.msra.mxu0 0.0
    %756 = vmatprep.subr.mxu0 0.0
    %757 = vmatpush1.msra.mxu0 0.0
    %758 = vmatprep.subr.mxu0 0.0
    %759 = vmatpush1.msra.mxu0 %v713
    %760 = vmatprep.subr.mxu0 0.0
    %761 = vmatpush1.msra.mxu0 %v712
    %762 = vmatprep.subr.mxu0 0.0
    %763 = vmatpush1.msra.mxu0 %v711
    %764 = vmatprep.subr.mxu0 0.0
    %765 = vmatpush1.msra.mxu0 %v710
    %766 = vmatprep.subr.mxu0 0.0
    %767 = vmatpush2.msra.mxu0 0.0
    %768 = vmatprep.subr.mxu0 0.0
    %769 = vmatpush2.msra.mxu0 0.0
    %770 = vmatprep.subr.mxu0 0.0
    %771 = vmatpush2.msra.mxu0 0.0
    %772 = vmatprep.subr.mxu0 0.0
    %773 = vmatpush2.msra.mxu0 0.0
    %774 = vmatprep.subr.mxu0 0.0
    %775 = vmatpush2.msra.mxu0 0.0
    %776 = vmatprep.subr.mxu0 0.0
    %777 = vmatpush2.msra.mxu0 0.0
    %778 = vmatprep.subr.mxu0 0.0
    %779 = vmatpush2.msra.mxu0 0.0
    %780 = vmatprep.subr.mxu0 0.0
    %781 = vmatpush2.msra.mxu0 0.0
    %782 = vmatprep.subr.mxu0 0.0
    %783 = vmatpush2.msra.mxu0 0.0
    %784 = vmatprep.subr.mxu0 0.0
    %785 = vmatpush2.msra.mxu0 0.0
    %786 = vmatprep.subr.mxu0 0.0
    %787 = vmatpush2.msra.mxu0 0.0
    %788 = vmatprep.subr.mxu0 0.0
    %789 = vmatpush2.msra.mxu0 0.0
    %790 = vmatprep.subr.mxu0 0.0
    %791 = vmatpush2.msra.mxu0 0.0
    %792 = vmatprep.subr.mxu0 0.0
    %793 = vmatpush2.msra.mxu0 0.0
    %794 = vmatprep.subr.mxu0 0.0
    %795 = vmatpush2.msra.mxu0 0.0
    %796 = vmatprep.subr.mxu0 0.0
    %797 = vmatpush2.msra.mxu0 0.0
    %798 = vmatprep.mubr.f32.mxu0 0.0
    %799 = vmatmul.mubr.f32.gmra.mxu0 %v729
    %v800 = vpop.f32.mrf.mxu0
    %v801 = vadd.f32 %v721, %v800
    %v802 = vpop.f32.mrf.mxu0
    %803 = vmatprep.mubr.f32.mxu0 0.0
    %804 = vmatmul.mubr.f32.gmra.mxu0 %v732
    %v805 = vpop.f32.mrf.mxu0
    %v806 = vadd.f32 %v726, %v805
    %v807 = vpop.f32.mrf.mxu0
    %808 = vdwg.mxu0
    %809 = vst [vmem:[#allocation2] sm:$0xff] %v801
    %810 = vst [vmem:[#allocation2 + $0x8] sm:$0xf] %v806
    // Predicated region
    $region38: #{tpu_custom_call.1} parent=1 // pred_check
      _
    $region39: #{tpu_custom_call.1} parent=1 // pred_check_branch
      %812 = sbr.rel (0) target = $region41
    $region40: #{tpu_custom_call.1} parent=1 // pred_region
      %s814 = ssub.s32 256, 256
      %815 = vsyncadd [#allocation3], %s814
      %s816 = sshll.u32 [#allocation2], 4
      %s817 = int_to_ptr.vmem [resolvable:$true] %s816
      %822 = dma.vmem_to_hbm [thread:$0]  %s817, 256, %s9, [#allocation3], 128, 128, 8
    $region41: #{tpu_custom_call.1} parent=1 // pred_fallthru
      _
    // Predicated region
    $region42: #{tpu_custom_call.1} parent=1 // pred_check
      _
    $region43: #{tpu_custom_call.1} parent=1 // pred_check_branch
      %824 = sbr.rel (0) target = $region45
    $region44: #{tpu_custom_call.1} parent=1 // pred_region
      %825 = dma.done [#allocation3], 256
    $region45: #{tpu_custom_call.1} parent=1 // pred_fallthru
      _
    %826 = vsyncpa [#allocation3], 1

</llo_original>
